<compile_context>
chip_gen: v6e
topology: v6e:2x2x1
jax: 0.10.0
libtpu: 0.0.40
codegen_flags: <defaults>
</compile_context>

<pallas_src>
import jax
import jax.numpy as jnp
from jax.experimental import pallas as pl
from jax.experimental.pallas import tpu as pltpu

HIDDEN = 40


def _round_up(n, m):
    return ((n + m - 1) // m) * m


def sine_mlp_kernel(xT_ref, w1_ref, b1_ref, w2_ref, b2_ref, w3_ref, b3_ref, oT_ref):
    """Feature-major (batch-on-lanes) 3-layer MLP.

    xT: (1, TN) f32   w1: (40, 1) f32  b1: (40, 1) f32
    w2: (40, 40) bf16 b2: (40, 1) f32
    w3: (40, 1) f32   b3: (1, 1) f32 scalar in SMEM
    oT: (1, TN) f32
    """
    xT = xT_ref[...]                                              # (1, TN) lane-dense

    # Layer 1 (in_features=1): degenerate K=1 matmul -> VPU broadcast outer product.
    # Kept in f32 (v5e VPU has no bf16 path); on v6e/v7x this could also run bf16.
    h1 = jnp.maximum(w1_ref[...] * xT + b1_ref[...], 0.0)         # (40, TN) f32

    # Layer 2 (40x40): the only real matmul. bf16 operands (MXU-native on every
    # generation), f32 accumulation -> negligible error for K=40.
    h2 = jnp.dot(w2_ref[...], h1.astype(jnp.bfloat16),
                 preferred_element_type=jnp.float32) + b2_ref[...]
    h2 = jnp.maximum(h2, 0.0)                                     # (40, TN) f32

    # Layer 3 (out_features=1): elementwise multiply + sublane (axis-0) reduce on
    # VPU/XLU, avoiding an MXU pass that would use <1% of the array.
    # (Lowering check: this should be cross-vreg adds + one sublane reduce, no transpose.)
    y = jnp.sum(w3_ref[...] * h2, axis=0, keepdims=True) + b3_ref[0, 0]   # (1, TN)
    oT_ref[...] = y.astype(oT_ref.dtype)


def _run_pallas(xT, w1_c, b1_c, w2_bf, b2_c, w3_c, b3_s, n_pad, tile_n,
                *, core_parallel, single_buffer_weights):
    const = lambda i: (0, 0)
    if single_buffer_weights:
        # Loop-invariant inputs: block index never changes, so a single buffer
        # suffices (saves VMEM + startup DMAs).
        wspec = lambda shape: pl.BlockSpec(shape, const, pipeline_mode=pl.Buffered(1))
    else:
        wspec = lambda shape: pl.BlockSpec(shape, const)

    if core_parallel and hasattr(pltpu, "CORE_PARALLEL"):
        dim_sem = (pltpu.CORE_PARALLEL,)   # v7x: actually shard batch tiles over both TCs
    else:
        dim_sem = ("parallel",)

    out = pl.pallas_call(
        sine_mlp_kernel,
        out_shape=jax.ShapeDtypeStruct((1, n_pad), jnp.float32),
        grid=(n_pad // tile_n,),
        in_specs=[
            pl.BlockSpec((1, tile_n), lambda i: (0, i)),   # x tile (streamed/pipelined)
            wspec((HIDDEN, 1)),                            # w1 (resident)
            wspec((HIDDEN, 1)),                            # b1
            wspec((HIDDEN, HIDDEN)),                       # w2 (bf16, resident)
            wspec((HIDDEN, 1)),                            # b2
            wspec((HIDDEN, 1)),                            # w3
            pl.BlockSpec(memory_space=pltpu.SMEM),         # b3 scalar in SMEM
        ],
        out_specs=pl.BlockSpec((1, tile_n), lambda i: (0, i)),
        compiler_params=pltpu.CompilerParams(
            dimension_semantics=dim_sem,
            # <= ~48 MiB so the config stays safe on v7x's 64 MiB physical VMEM
            # while still allowing the 32768-wide tiles.
            vmem_limit_bytes=48 * 1024 * 1024,
        ),
    )(xT, w1_c, b1_c, w2_bf, b2_c, w3_c, b3_s)
    return jax.block_until_ready(out)


def sine_model_forward(x, params, tile_n=32768):
    """x: (N, 1) float32.  params: PyTorch-convention weights/biases."""
    n = x.shape[0]
    if n == 0:
        return jnp.zeros((0, 1), jnp.float32)

    # Lane-aligned tile; small batches collapse to a single tile.
    tile_n = _round_up(min(tile_n, _round_up(n, 128)), 128)
    n_pad = _round_up(n, tile_n)

    # Lane-dense transposed layout: batch along the 128-lane axis.
    xT = x.reshape(1, n).astype(jnp.float32)
    if n_pad != n:
        xT = jnp.pad(xT, ((0, 0), (0, n_pad - n)))
    # TODO(synk): for very large N keep x as a (1, N) lane-major array upstream so
    # this pad/reshape HBM pass disappears entirely.

    # PyTorch convention: W is (out_features, in_features); y = x @ W.T + b.
    # In the transposed layout that is h_out = W @ h_in, so w2 is used as-is.
    w1_c = params["w1"].reshape(HIDDEN, 1).astype(jnp.float32)   # (40, 1)
    b1_c = params["b1"].reshape(HIDDEN, 1).astype(jnp.float32)   # (40, 1)
    w2_bf = params["w2"].astype(jnp.bfloat16)                    # (40, 40) bf16 MXU operand
    b2_c = params["b2"].reshape(HIDDEN, 1).astype(jnp.float32)   # (40, 1)
    w3_c = params["w3"].reshape(HIDDEN, 1).astype(jnp.float32)   # PyTorch (1, 40) -> (40, 1)
    b3_s = params["b3"].reshape(1, 1).astype(jnp.float32)        # scalar, via SMEM

    args = (xT, w1_c, b1_c, w2_bf, b2_c, w3_c, b3_s, n_pad, tile_n)
    try:
        # Preferred config: CORE_PARALLEL batch axis + single-buffered weights.
        outT = _run_pallas(*args, core_parallel=True, single_buffer_weights=True)
    except Exception:
        # Conservative fallback (identical math) for platforms/jax versions that
        # reject CORE_PARALLEL or pipeline_mode on this grid.
        outT = _run_pallas(*args, core_parallel=False, single_buffer_weights=False)

    return outT[0, :n].reshape(n, 1)


def init_params(key):
    """Deterministic init mimicking nn.Linear default (U[-1/sqrt(fan_in), 1/sqrt(fan_in)])."""
    ks = jax.random.split(key, 6)

    def linear_init(kw, kb, out_f, in_f):
        bound = 1.0 / (in_f ** 0.5)
        w = jax.random.uniform(kw, (out_f, in_f), jnp.float32, -bound, bound)
        b = jax.random.uniform(kb, (out_f,), jnp.float32, -bound, bound)
        return w, b

    w1, b1 = linear_init(ks[0], ks[1], HIDDEN, 1)
    w2, b2 = linear_init(ks[2], ks[3], HIDDEN, HIDDEN)
    w3, b3 = linear_init(ks[4], ks[5], 1, HIDDEN)
    return {"w1": w1, "b1": b1, "w2": w2, "b2": b2, "w3": w3, "b3": b3}


def reference_forward(x, p):
    h1 = jnp.maximum(x @ p["w1"].T + p["b1"], 0.0)
    h2 = jnp.maximum(h1 @ p["w2"].T + p["b2"], 0.0)
    return h2 @ p["w3"].T + p["b3"]


if __name__ == "__main__":
    key = jax.random.PRNGKey(0)
    kp, kx1, kx2 = jax.random.split(key, 3)
    params = init_params(kp)

    # Tolerances reflect the bf16 layer-2 matmul (f32 accumulation, K=40).
    ATOL, RTOL = 5e-2, 1e-2

    # Small batch of scalar inputs (sine-regression style): x ~ U[-5, 5], shape (8, 1).
    x_small = jax.random.uniform(kx1, (8, 1), jnp.float32, -5.0, 5.0)
    out_small = jax.block_until_ready(sine_model_forward(x_small, params))
    ref_small = reference_forward(x_small, params)
    assert out_small.shape == (8, 1)
    assert jnp.allclose(out_small, ref_small, atol=ATOL, rtol=RTOL)

    # Larger, non-tile-aligned batch (single tile after clamping).
    x_big = jax.random.uniform(kx2, (2500, 1), jnp.float32, -5.0, 5.0)
    out_big = jax.block_until_ready(sine_model_forward(x_big, params))
    ref_big = reference_forward(x_big, params)
    assert out_big.shape == (2500, 1)
    assert jnp.allclose(out_big, ref_big, atol=ATOL, rtol=RTOL)

    # Same batch with a small explicit tile to exercise the multi-tile grid + tail padding.
    out_big_tiled = jax.block_until_ready(sine_model_forward(x_big, params, tile_n=512))
    assert out_big_tiled.shape == (2500, 1)
    assert jnp.allclose(out_big_tiled, ref_big, atol=ATOL, rtol=RTOL)

    print("KERNEL_OK")
</pallas_src>

<mosaic_0001>
module attributes {stable_mosaic.version = 11 : i64} {
  func.func @sine_mlp_kernel(%arg0: i32, %arg1: memref<1x128xf32, #tpu.memory_space<vmem>>, %arg2: memref<40x1xf32, #tpu.memory_space<vmem>>, %arg3: memref<40x1xf32, #tpu.memory_space<vmem>>, %arg4: memref<40x40xbf16, #tpu.memory_space<vmem>>, %arg5: memref<40x1xf32, #tpu.memory_space<vmem>>, %arg6: memref<40x1xf32, #tpu.memory_space<vmem>>, %arg7: memref<1x1xf32, #tpu.memory_space<smem>>, %arg8: memref<1x128xf32, #tpu.memory_space<vmem>>) attributes {dimension_semantics = [#tpu.dimension_semantics<core_parallel>], iteration_bounds = array<i64: 1>, scalar_prefetch = 0 : i64, scratch_operands = 0 : i64, tpu.core_type = #tpu.core_type<tc>, window_params = [{transform_indices = @transform_0, window_bounds = array<i64: 1, 128>}, {pipeline_mode = #tpu.pipeline_mode<synchronous>, transform_indices = @transform_1, window_bounds = array<i64: 40, 1>}, {pipeline_mode = #tpu.pipeline_mode<synchronous>, transform_indices = @transform_2, window_bounds = array<i64: 40, 1>}, {pipeline_mode = #tpu.pipeline_mode<synchronous>, transform_indices = @transform_3, window_bounds = array<i64: 40, 40>}, {pipeline_mode = #tpu.pipeline_mode<synchronous>, transform_indices = @transform_4, window_bounds = array<i64: 40, 1>}, {pipeline_mode = #tpu.pipeline_mode<synchronous>, transform_indices = @transform_5, window_bounds = array<i64: 40, 1>}, {transform_indices = @transform_6, window_bounds = array<i64: 1, 1>}, {transform_indices = @transform_7, window_bounds = array<i64: 1, 128>}]} {
    %c0 = arith.constant 0 : index
    %c0_0 = arith.constant 0 : index
    %0 = vector.load %arg1[%c0, %c0_0] : memref<1x128xf32, #tpu.memory_space<vmem>>, vector<1x128xf32>
    %c0_1 = arith.constant 0 : index
    %c0_2 = arith.constant 0 : index
    %1 = vector.load %arg2[%c0_1, %c0_2] : memref<40x1xf32, #tpu.memory_space<vmem>>, vector<40x1xf32>
    %2 = vector.broadcast %1 : vector<40x1xf32> to vector<40x128xf32>
    %3 = vector.broadcast %0 : vector<1x128xf32> to vector<40x128xf32>
    %4 = arith.mulf %2, %3 : vector<40x128xf32>
    %c0_3 = arith.constant 0 : index
    %c0_4 = arith.constant 0 : index
    %5 = vector.load %arg3[%c0_3, %c0_4] : memref<40x1xf32, #tpu.memory_space<vmem>>, vector<40x1xf32>
    %6 = vector.broadcast %5 : vector<40x1xf32> to vector<40x128xf32>
    %7 = arith.addf %4, %6 : vector<40x128xf32>
    %cst = arith.constant 0.000000e+00 : f32
    %8 = vector.broadcast %cst : f32 to vector<40x128xf32>
    %9 = arith.maximumf %7, %8 : vector<40x128xf32>
    %c0_5 = arith.constant 0 : index
    %c0_6 = arith.constant 0 : index
    %10 = vector.load %arg4[%c0_5, %c0_6] : memref<40x40xbf16, #tpu.memory_space<vmem>>, vector<40x40xbf16>
    %11 = arith.truncf %9 : vector<40x128xf32> to vector<40x128xbf16>
    %cst_7 = arith.constant dense<0.000000e+00> : vector<40x128xf32>
    %12 = tpu.matmul %10, %11, %cst_7 {dimension_numbers = #tpu.dot_dimension_numbers<[1], [0], [0], [1], [0, 0, 1, 1], [], []>} : vector<40x40xbf16>, vector<40x128xbf16>, vector<40x128xf32> -> vector<40x128xf32>
    %c0_8 = arith.constant 0 : index
    %c0_9 = arith.constant 0 : index
    %13 = vector.load %arg5[%c0_8, %c0_9] : memref<40x1xf32, #tpu.memory_space<vmem>>, vector<40x1xf32>
    %14 = vector.broadcast %13 : vector<40x1xf32> to vector<40x128xf32>
    %15 = arith.addf %12, %14 : vector<40x128xf32>
    %cst_10 = arith.constant 0.000000e+00 : f32
    %16 = vector.broadcast %cst_10 : f32 to vector<40x128xf32>
    %17 = arith.maximumf %15, %16 : vector<40x128xf32>
    %c0_11 = arith.constant 0 : index
    %c0_12 = arith.constant 0 : index
    %18 = vector.load %arg6[%c0_11, %c0_12] : memref<40x1xf32, #tpu.memory_space<vmem>>, vector<40x1xf32>
    %19 = vector.broadcast %18 : vector<40x1xf32> to vector<40x128xf32>
    %20 = arith.mulf %19, %17 : vector<40x128xf32>
    %cst_13 = arith.constant dense<0.000000e+00> : vector<128xf32>
    %21 = vector.multi_reduction <add>, %20, %cst_13 [0] : vector<40x128xf32> to vector<128xf32>
    %22 = vector.shape_cast %21 : vector<128xf32> to vector<1x128xf32>
    %c0_14 = arith.constant 0 : index
    %c0_15 = arith.constant 0 : index
    %23 = memref.load %arg7[%c0_14, %c0_15] : memref<1x1xf32, #tpu.memory_space<smem>>
    %24 = vector.broadcast %23 : f32 to vector<1x128xf32>
    %25 = arith.addf %22, %24 : vector<1x128xf32>
    %c0_16 = arith.constant 0 : index
    %c0_17 = arith.constant 0 : index
    %26 = vector.load %arg8[%c0_16, %c0_17] : memref<1x128xf32, #tpu.memory_space<vmem>>, vector<1x128xf32>
    tpu.vector_store %arg8[%c0_16, %c0_17], %25 {strides = array<i32>} : memref<1x128xf32, #tpu.memory_space<vmem>>, vector<1x128xf32>,
    return
  }
  func.func @transform_0(%arg0: i32) -> (i32, i32) {
    %c0_i32 = arith.constant 0 : i32
    %c0_i32_0 = arith.constant 0 : i32
    return %c0_i32, %arg0 : i32, i32
  }
  func.func @transform_1(%arg0: i32) -> (i32, i32) {
    %c0_i32 = arith.constant 0 : i32
    %c0_i32_0 = arith.constant 0 : i32
    %c0_i32_1 = arith.constant 0 : i32
    return %c0_i32, %c0_i32_0 : i32, i32
  }
  func.func @transform_2(%arg0: i32) -> (i32, i32) {
    %c0_i32 = arith.constant 0 : i32
    %c0_i32_0 = arith.constant 0 : i32
    %c0_i32_1 = arith.constant 0 : i32
    return %c0_i32, %c0_i32_0 : i32, i32
  }
  func.func @transform_3(%arg0: i32) -> (i32, i32) {
    %c0_i32 = arith.constant 0 : i32
    %c0_i32_0 = arith.constant 0 : i32
    %c0_i32_1 = arith.constant 0 : i32
    return %c0_i32, %c0_i32_0 : i32, i32
  }
  func.func @transform_4(%arg0: i32) -> (i32, i32) {
    %c0_i32 = arith.constant 0 : i32
    %c0_i32_0 = arith.constant 0 : i32
    %c0_i32_1 = arith.constant 0 : i32
    return %c0_i32, %c0_i32_0 : i32, i32
  }
  func.func @transform_5(%arg0: i32) -> (i32, i32) {
    %c0_i32 = arith.constant 0 : i32
    %c0_i32_0 = arith.constant 0 : i32
    %c0_i32_1 = arith.constant 0 : i32
    return %c0_i32, %c0_i32_0 : i32, i32
  }
  func.func @transform_6(%arg0: i32) -> (i32, i32) {
    %c0_i32 = arith.constant 0 : i32
    %c0_i32_0 = arith.constant 0 : i32
    %c0_i32_1 = arith.constant 0 : i32
    return %c0_i32, %c0_i32_0 : i32, i32
  }
  func.func @transform_7(%arg0: i32) -> (i32, i32) {
    %c0_i32 = arith.constant 0 : i32
    %c0_i32_0 = arith.constant 0 : i32
    return %c0_i32, %arg0 : i32, i32
  }
}

module attributes {stable_mosaic.version = 11 : i64} {
  func.func @sine_mlp_kernel(%arg0: i32, %arg1: memref<1x128xf32, #tpu.memory_space<vmem>>, %arg2: memref<40x1xf32, #tpu.memory_space<vmem>>, %arg3: memref<40x1xf32, #tpu.memory_space<vmem>>, %arg4: memref<40x40xbf16, #tpu.memory_space<vmem>>, %arg5: memref<40x1xf32, #tpu.memory_space<vmem>>, %arg6: memref<40x1xf32, #tpu.memory_space<vmem>>, %arg7: memref<1x1xf32, #tpu.memory_space<smem>>, %arg8: memref<1x128xf32, #tpu.memory_space<vmem>>) attributes {dimension_semantics = [#tpu.dimension_semantics<parallel>], iteration_bounds = array<i64: 1>, scalar_prefetch = 0 : i64, scratch_operands = 0 : i64, tpu.core_type = #tpu.core_type<tc>, window_params = [{transform_indices = @transform_0, window_bounds = array<i64: 1, 128>}, {pipeline_mode = #tpu.pipeline_mode<synchronous>, transform_indices = @transform_1, window_bounds = array<i64: 40, 1>}, {pipeline_mode = #tpu.pipeline_mode<synchronous>, transform_indices = @transform_2, window_bounds = array<i64: 40, 1>}, {pipeline_mode = #tpu.pipeline_mode<synchronous>, transform_indices = @transform_3, window_bounds = array<i64: 40, 40>}, {pipeline_mode = #tpu.pipeline_mode<synchronous>, transform_indices = @transform_4, window_bounds = array<i64: 40, 1>}, {pipeline_mode = #tpu.pipeline_mode<synchronous>, transform_indices = @transform_5, window_bounds = array<i64: 40, 1>}, {transform_indices = @transform_6, window_bounds = array<i64: 1, 1>}, {transform_indices = @transform_7, window_bounds = array<i64: 1, 128>}]} {
    %c0 = arith.constant 0 : index
    %c0_0 = arith.constant 0 : index
    %0 = vector.load %arg1[%c0, %c0_0] : memref<1x128xf32, #tpu.memory_space<vmem>>, vector<1x128xf32>
    %c0_1 = arith.constant 0 : index
    %c0_2 = arith.constant 0 : index
    %1 = vector.load %arg2[%c0_1, %c0_2] : memref<40x1xf32, #tpu.memory_space<vmem>>, vector<40x1xf32>
    %2 = vector.broadcast %1 : vector<40x1xf32> to vector<40x128xf32>
    %3 = vector.broadcast %0 : vector<1x128xf32> to vector<40x128xf32>
    %4 = arith.mulf %2, %3 : vector<40x128xf32>
    %c0_3 = arith.constant 0 : index
    %c0_4 = arith.constant 0 : index
    %5 = vector.load %arg3[%c0_3, %c0_4] : memref<40x1xf32, #tpu.memory_space<vmem>>, vector<40x1xf32>
    %6 = vector.broadcast %5 : vector<40x1xf32> to vector<40x128xf32>
    %7 = arith.addf %4, %6 : vector<40x128xf32>
    %cst = arith.constant 0.000000e+00 : f32
    %8 = vector.broadcast %cst : f32 to vector<40x128xf32>
    %9 = arith.maximumf %7, %8 : vector<40x128xf32>
    %c0_5 = arith.constant 0 : index
    %c0_6 = arith.constant 0 : index
    %10 = vector.load %arg4[%c0_5, %c0_6] : memref<40x40xbf16, #tpu.memory_space<vmem>>, vector<40x40xbf16>
    %11 = arith.truncf %9 : vector<40x128xf32> to vector<40x128xbf16>
    %cst_7 = arith.constant dense<0.000000e+00> : vector<40x128xf32>
    %12 = tpu.matmul %10, %11, %cst_7 {dimension_numbers = #tpu.dot_dimension_numbers<[1], [0], [0], [1], [0, 0, 1, 1], [], []>} : vector<40x40xbf16>, vector<40x128xbf16>, vector<40x128xf32> -> vector<40x128xf32>
    %c0_8 = arith.constant 0 : index
    %c0_9 = arith.constant 0 : index
    %13 = vector.load %arg5[%c0_8, %c0_9] : memref<40x1xf32, #tpu.memory_space<vmem>>, vector<40x1xf32>
    %14 = vector.broadcast %13 : vector<40x1xf32> to vector<40x128xf32>
    %15 = arith.addf %12, %14 : vector<40x128xf32>
    %cst_10 = arith.constant 0.000000e+00 : f32
    %16 = vector.broadcast %cst_10 : f32 to vector<40x128xf32>
    %17 = arith.maximumf %15, %16 : vector<40x128xf32>
    %c0_11 = arith.constant 0 : index
    %c0_12 = arith.constant 0 : index
    %18 = vector.load %arg6[%c0_11, %c0_12] : memref<40x1xf32, #tpu.memory_space<vmem>>, vector<40x1xf32>
    %19 = vector.broadcast %18 : vector<40x1xf32> to vector<40x128xf32>
    %20 = arith.mulf %19, %17 : vector<40x128xf32>
    %cst_13 = arith.constant dense<0.000000e+00> : vector<128xf32>
    %21 = vector.multi_reduction <add>, %20, %cst_13 [0] : vector<40x128xf32> to vector<128xf32>
    %22 = vector.shape_cast %21 : vector<128xf32> to vector<1x128xf32>
    %c0_14 = arith.constant 0 : index
    %c0_15 = arith.constant 0 : index
    %23 = memref.load %arg7[%c0_14, %c0_15] : memref<1x1xf32, #tpu.memory_space<smem>>
    %24 = vector.broadcast %23 : f32 to vector<1x128xf32>
    %25 = arith.addf %22, %24 : vector<1x128xf32>
    %c0_16 = arith.constant 0 : index
    %c0_17 = arith.constant 0 : index
    %26 = vector.load %arg8[%c0_16, %c0_17] : memref<1x128xf32, #tpu.memory_space<vmem>>, vector<1x128xf32>
    tpu.vector_store %arg8[%c0_16, %c0_17], %25 {strides = array<i32>} : memref<1x128xf32, #tpu.memory_space<vmem>>, vector<1x128xf32>,
    return
  }
  func.func @transform_0(%arg0: i32) -> (i32, i32) {
    %c0_i32 = arith.constant 0 : i32
    %c0_i32_0 = arith.constant 0 : i32
    return %c0_i32, %arg0 : i32, i32
  }
  func.func @transform_1(%arg0: i32) -> (i32, i32) {
    %c0_i32 = arith.constant 0 : i32
    %c0_i32_0 = arith.constant 0 : i32
    %c0_i32_1 = arith.constant 0 : i32
    return %c0_i32, %c0_i32_0 : i32, i32
  }
  func.func @transform_2(%arg0: i32) -> (i32, i32) {
    %c0_i32 = arith.constant 0 : i32
    %c0_i32_0 = arith.constant 0 : i32
    %c0_i32_1 = arith.constant 0 : i32
    return %c0_i32, %c0_i32_0 : i32, i32
  }
  func.func @transform_3(%arg0: i32) -> (i32, i32) {
    %c0_i32 = arith.constant 0 : i32
    %c0_i32_0 = arith.constant 0 : i32
    %c0_i32_1 = arith.constant 0 : i32
    return %c0_i32, %c0_i32_0 : i32, i32
  }
  func.func @transform_4(%arg0: i32) -> (i32, i32) {
    %c0_i32 = arith.constant 0 : i32
    %c0_i32_0 = arith.constant 0 : i32
    %c0_i32_1 = arith.constant 0 : i32
    return %c0_i32, %c0_i32_0 : i32, i32
  }
  func.func @transform_5(%arg0: i32) -> (i32, i32) {
    %c0_i32 = arith.constant 0 : i32
    %c0_i32_0 = arith.constant 0 : i32
    %c0_i32_1 = arith.constant 0 : i32
    return %c0_i32, %c0_i32_0 : i32, i32
  }
  func.func @transform_6(%arg0: i32) -> (i32, i32) {
    %c0_i32 = arith.constant 0 : i32
    %c0_i32_0 = arith.constant 0 : i32
    %c0_i32_1 = arith.constant 0 : i32
    return %c0_i32, %c0_i32_0 : i32, i32
  }
  func.func @transform_7(%arg0: i32) -> (i32, i32) {
    %c0_i32 = arith.constant 0 : i32
    %c0_i32_0 = arith.constant 0 : i32
    return %c0_i32, %arg0 : i32, i32
  }
}

</mosaic_0001>

<llo_original>
// kernel: tpu_custom_call.1
$region0: #{tpu_custom_call.1}
  #allocation0 [shape = 'u32[]', space=smem, size = 0x4, offset = 0x4, fixed_abs, tag = 'smem constant byte address 0x4 - core index']
  #allocation1 [shape = 'u32[144,128]{1,0:T(1,128)}', space=vmem, size = 0x12000, scoped, tag = 'internal scratch']
  #allocation2 [shape = 'f32[1,1]{1,0:T(1,128)S(6)}', space=smem, size = 0x200, scoped, tag = 'scoped memory for tpu_custom_call.1']
  %s0 = inlined_call_operand.vmem [shape: f32[1,128], index: 0, kind: input, shape index: {}]
  %s1 = inlined_call_operand.vmem [shape: f32[40,1], index: 1, kind: input, shape index: {}]
  %s2 = inlined_call_operand.vmem [shape: f32[40,1], index: 2, kind: input, shape index: {}]
  %s3 = inlined_call_operand.vmem [shape: bf16[40,40], index: 3, kind: input, shape index: {}]
  %s4 = inlined_call_operand.vmem [shape: f32[40,1], index: 4, kind: input, shape index: {}]
  %s5 = inlined_call_operand.vmem [shape: f32[40,1], index: 5, kind: input, shape index: {}]
  %s6 = inlined_call_operand.<no memory space> [shape: f32[1,1], index: 6, kind: input, shape index: {}]
  %s7 = inlined_call_operand.hbm [shape: f32[1,128], index: 7, kind: output, shape index: {}]
  %s8 = sld [smem:[#allocation0]]
  $region38: #{tpu_custom_call.1} parent=0
    _
  %s10 = ssub.s32 1, %s8
  %s11 = scalar_select 0, %s10, %s8
  %12 = sst [smem:[#allocation2]] %s6
  $region1: #{tpu_custom_call.1} parent=0
    #allocation3 [shape = 'u8[512]{0}', space=vmem, size = 0x400, scoped, tag = 'output window, operand 0, single buffered']
    #allocation4 [shape = 's32[1]{0}', space=sflag, size = 0x4, scoped, tag = 'scoped memory for tpu_custom_call.1']
    %13 = vsyncpa [#allocation4], 0
    // Predicated region
    $region2: #{tpu_custom_call.1} parent=1 // pred_check
      _
    $region3: #{tpu_custom_call.1} parent=1 // pred_check_branch
      %15 = sbr.rel (0) target = $region5
    $region4: #{tpu_custom_call.1} parent=1 // pred_region
      %p16 = scmp.lt.s32.totalorder %s11, 0
      %s17 = scalar_select %p16, %s11, 0
      %s18 = scalar_lea.vmem %s0, %s17
    $region5: #{tpu_custom_call.1} parent=1 // pred_fallthru
      _
    // Predicated region
    $region6: #{tpu_custom_call.1} parent=1 // pred_check
      _
    $region7: #{tpu_custom_call.1} parent=1 // pred_check_branch
      %20 = sbr.rel (0) target = $region9
    $region8: #{tpu_custom_call.1} parent=1 // pred_region
      _
    $region9: #{tpu_custom_call.1} parent=1 // pred_fallthru
      _
    // Predicated region
    $region10: #{tpu_custom_call.1} parent=1 // pred_check
      _
    $region11: #{tpu_custom_call.1} parent=1 // pred_check_branch
      %22 = sbr.rel (0) target = $region13
    $region12: #{tpu_custom_call.1} parent=1 // pred_region
      _
    $region13: #{tpu_custom_call.1} parent=1 // pred_fallthru
      _
    // Predicated region
    $region14: #{tpu_custom_call.1} parent=1 // pred_check
      _
    $region15: #{tpu_custom_call.1} parent=1 // pred_check_branch
      %24 = sbr.rel (0) target = $region17
    $region16: #{tpu_custom_call.1} parent=1 // pred_region
      _
    $region17: #{tpu_custom_call.1} parent=1 // pred_fallthru
      _
    // Predicated region
    $region18: #{tpu_custom_call.1} parent=1 // pred_check
      _
    $region19: #{tpu_custom_call.1} parent=1 // pred_check_branch
      %26 = sbr.rel (0) target = $region21
    $region20: #{tpu_custom_call.1} parent=1 // pred_region
      _
    $region21: #{tpu_custom_call.1} parent=1 // pred_fallthru
      _
    // Predicated region
    $region22: #{tpu_custom_call.1} parent=1 // pred_check
      _
    $region23: #{tpu_custom_call.1} parent=1 // pred_check_branch
      %28 = sbr.rel (0) target = $region25
    $region24: #{tpu_custom_call.1} parent=1 // pred_region
      _
    $region25: #{tpu_custom_call.1} parent=1 // pred_fallthru
      _
    // Predicated region
    $region26: #{tpu_custom_call.1} parent=1 // pred_check
      _
    $region27: #{tpu_custom_call.1} parent=1 // pred_check_branch
      %30 = sbr.rel (0) target = $region29
    $region28: #{tpu_custom_call.1} parent=1 // pred_region
      _
    $region29: #{tpu_custom_call.1} parent=1 // pred_fallthru
      _
    %p31 = scmp.lt.s32.totalorder %s11, 0
    %s32 = scalar_select %p31, %s11, 0
    %s33 = scalar_lea.vmem %s0, %s32
    %p34 = scmp.lt.s32.totalorder %s11, 0
    %s35 = scalar_select %p34, %s11, 0
    %s36 = scalar_lea.vmem %s0, %s35
    %v38 = vld [vmem:[%s36] sm:$0x1]
    %v39 = vld [vmem:[%s1] sm:$0xff]
    %v40 = vld [vmem:[%s1 + $0x8] sm:$0xff]
    %v41 = vld [vmem:[%s1 + $0x10] sm:$0xff]
    %v42 = vld [vmem:[%s1 + $0x18] sm:$0xff]
    %v43 = vld [vmem:[%s1 + $0x20] sm:$0xff]
    %45 = vset.pattern.permute.xlu0 0
    %46 = vperm.xlu0 %45, %v39
    %v47 = vpop.permute.xlu0 %46
    %50 = vset.pattern.permute.xlu0 0
    %51 = vperm.xlu0 %50, %v40
    %v52 = vpop.permute.xlu0 %51
    %55 = vset.pattern.permute.xlu0 0
    %56 = vperm.xlu0 %55, %v41
    %v57 = vpop.permute.xlu0 %56
    %60 = vset.pattern.permute.xlu0 0
    %61 = vperm.xlu0 %60, %v42
    %v62 = vpop.permute.xlu0 %61
    %65 = vset.pattern.permute.xlu0 0
    %66 = vperm.xlu0 %65, %v43
    %v67 = vpop.permute.xlu0 %66
    %v70 = vlaneseq
    %v71 = vshrl.u32 %v70, 7
    %v72 = vsub.s32 0, %v71
    %v73 = vrot.slane %v38, %v72
    %v75 = vmul.f32 %v47, %v73
    %v76 = vmul.f32 %v52, %v73
    %v77 = vmul.f32 %v57, %v73
    %v78 = vmul.f32 %v62, %v73
    %v79 = vmul.f32 %v67, %v73
    %v80 = vld [vmem:[%s2] sm:$0xff]
    %v81 = vld [vmem:[%s2 + $0x8] sm:$0xff]
    %v82 = vld [vmem:[%s2 + $0x10] sm:$0xff]
    %v83 = vld [vmem:[%s2 + $0x18] sm:$0xff]
    %v84 = vld [vmem:[%s2 + $0x20] sm:$0xff]
    %86 = vset.pattern.permute.xlu0 0
    %87 = vperm.xlu0 %86, %v80
    %v88 = vpop.permute.xlu0 %87
    %91 = vset.pattern.permute.xlu0 0
    %92 = vperm.xlu0 %91, %v81
    %v93 = vpop.permute.xlu0 %92
    %96 = vset.pattern.permute.xlu0 0
    %97 = vperm.xlu0 %96, %v82
    %v98 = vpop.permute.xlu0 %97
    %101 = vset.pattern.permute.xlu0 0
    %102 = vperm.xlu0 %101, %v83
    %v103 = vpop.permute.xlu0 %102
    %106 = vset.pattern.permute.xlu0 0
    %107 = vperm.xlu0 %106, %v84
    %v108 = vpop.permute.xlu0 %107
    %v110 = vadd.f32 %v75, %v88
    %v111 = vadd.f32 %v76, %v93
    %v112 = vadd.f32 %v77, %v98
    %v113 = vadd.f32 %v78, %v103
    %v114 = vadd.f32 %v79, %v108
    %v115 = vmax.f32 %v110, 0.0
    %v116 = vmax.f32 %v111, 0.0
    %v117 = vmax.f32 %v112, 0.0
    %v118 = vmax.f32 %v113, 0.0
    %v119 = vmax.f32 %v114, 0.0
    %v120 = vld [vmem:[%s3] sm:$0xf]
    %v121 = vld [vmem:[%s3 + $0x4] sm:$0xf]
    %v122 = vld [vmem:[%s3 + $0x8] sm:$0xf]
    %v123 = vld [vmem:[%s3 + $0xc] sm:$0xf]
    %v124 = vld [vmem:[%s3 + $0x10] sm:$0xf]
    %v125 = vpack.c.bf16 %v116, %v115
    %v126 = vpack.c.bf16 %v118, %v117
    %v127 = vpack.c.bf16 %v119, %v119
    %v128 = vld [vmem:[%s4] sm:$0xff]
    %v129 = vld [vmem:[%s4 + $0x8] sm:$0xff]
    %v130 = vld [vmem:[%s4 + $0x10] sm:$0xff]
    %v131 = vld [vmem:[%s4 + $0x18] sm:$0xff]
    %v132 = vld [vmem:[%s4 + $0x20] sm:$0xff]
    %134 = vset.pattern.permute.xlu0 0
    %135 = vperm.xlu0 %134, %v128
    %v136 = vpop.permute.xlu0 %135
    %139 = vset.pattern.permute.xlu0 0
    %140 = vperm.xlu0 %139, %v129
    %v141 = vpop.permute.xlu0 %140
    %144 = vset.pattern.permute.xlu0 0
    %145 = vperm.xlu0 %144, %v130
    %v146 = vpop.permute.xlu0 %145
    %149 = vset.pattern.permute.xlu0 0
    %150 = vperm.xlu0 %149, %v131
    %v151 = vpop.permute.xlu0 %150
    %154 = vset.pattern.permute.xlu0 0
    %155 = vperm.xlu0 %154, %v132
    %v156 = vpop.permute.xlu0 %155
    %v163 = vunpack.c.l.b16 %v120
    %v164 = vunpack.c.l.b16 %v121
    %v165 = vunpack.c.l.b16 %v122
    %v166 = vunpack.c.l.b16 %v123
    %v167 = vunpack.c.l.b16 %v124
    %v168 = vpack.c.b16 %v164, %v163
    %v169 = vpack.c.b16 %v166, %v165
    %v170 = vpack.c.b16 %v167, %v167
    %vm171 = vcmask 326656
    %v173 = vsel %vm171, %v168, 0
    %v176 = vsel %vm171, %v169, 0
    %v179 = vsel %vm171, %v170, 0
    %vm181 = vcmask 1043456
    %v183 = vsel %vm181, %v127, 0
    %185 = vmatprep.subr.bf16.mxu0 0
    %186 = vmatpush1.bf16.msra.mxu0 0
    %187 = vmatprep.subr.bf16.mxu0 0
    %188 = vmatpush1.bf16.msra.mxu0 0
    %189 = vmatprep.subr.bf16.mxu0 0
    %190 = vmatpush1.bf16.msra.mxu0 0
    %191 = vmatprep.subr.bf16.mxu0 0
    %192 = vmatpush1.bf16.msra.mxu0 0
    %193 = vmatprep.subr.bf16.mxu0 0
    %194 = vmatpush1.bf16.msra.mxu0 0
    %195 = vmatprep.subr.bf16.mxu0 0
    %196 = vmatpush1.bf16.msra.mxu0 %v183
    %197 = vmatprep.subr.bf16.mxu0 0
    %198 = vmatpush1.bf16.msra.mxu0 %v126
    %199 = vmatprep.subr.bf16.mxu0 0
    %200 = vmatpush1.bf16.msra.mxu0 %v125
    %201 = vmatprep.subr.bf16.mxu0 0
    %202 = vmatpush2.bf16.msra.mxu0 0
    %203 = vmatprep.subr.bf16.mxu0 0
    %204 = vmatpush2.bf16.msra.mxu0 0
    %205 = vmatprep.subr.bf16.mxu0 0
    %206 = vmatpush2.bf16.msra.mxu0 0
    %207 = vmatprep.subr.bf16.mxu0 0
    %208 = vmatpush2.bf16.msra.mxu0 0
    %209 = vmatprep.subr.bf16.mxu0 0
    %210 = vmatpush2.bf16.msra.mxu0 0
    %211 = vmatprep.subr.bf16.mxu0 0
    %212 = vmatpush2.bf16.msra.mxu0 0
    %213 = vmatprep.subr.bf16.mxu0 0
    %214 = vmatpush2.bf16.msra.mxu0 0
    %215 = vmatprep.subr.bf16.mxu0 0
    %216 = vmatpush2.bf16.msra.mxu0 0
    %217 = vmatprep.mubr.bf16.mxu0 0
    %218 = vmatmul.mubr.bf16.gmra.mxu0 %v173
    %v219 = vpop.f32.mrf.mxu0
    %v220 = vadd.f32 %v136, %v219
    %v221 = vpop.f32.mrf.mxu0
    %v222 = vpop.f32.mrf.mxu0
    %v223 = vadd.f32 %v141, %v222
    %v224 = vpop.f32.mrf.mxu0
    %225 = vmatprep.mubr.bf16.mxu0 0
    %226 = vmatmul.mubr.bf16.gmra.mxu0 %v176
    %v227 = vpop.f32.mrf.mxu0
    %v228 = vadd.f32 %v146, %v227
    %v229 = vpop.f32.mrf.mxu0
    %v230 = vpop.f32.mrf.mxu0
    %v231 = vadd.f32 %v151, %v230
    %v232 = vpop.f32.mrf.mxu0
    %233 = vmatprep.mubr.bf16.mxu0 0
    %234 = vmatmul.mubr.bf16.gmra.mxu0 %v179
    %v235 = vpop.f32.mrf.mxu0
    %v236 = vadd.f32 %v156, %v235
    %v237 = vpop.f32.mrf.mxu0
    %v238 = vpop.f32.mrf.mxu0
    %v239 = vpop.f32.mrf.mxu0
    %240 = vdwg.mxu0
    %v241 = vmax.f32 %v220, 0.0
    %v242 = vmax.f32 %v223, 0.0
    %v243 = vmax.f32 %v228, 0.0
    %v244 = vmax.f32 %v231, 0.0
    %v245 = vmax.f32 %v236, 0.0
    %v246 = vld [vmem:[%s5] sm:$0xff]
    %v247 = vld [vmem:[%s5 + $0x8] sm:$0xff]
    %v248 = vld [vmem:[%s5 + $0x10] sm:$0xff]
    %v249 = vld [vmem:[%s5 + $0x18] sm:$0xff]
    %v250 = vld [vmem:[%s5 + $0x20] sm:$0xff]
    %252 = vset.pattern.permute.xlu0 0
    %253 = vperm.xlu0 %252, %v246
    %v254 = vpop.permute.xlu0 %253
    %257 = vset.pattern.permute.xlu0 0
    %258 = vperm.xlu0 %257, %v247
    %v259 = vpop.permute.xlu0 %258
    %262 = vset.pattern.permute.xlu0 0
    %263 = vperm.xlu0 %262, %v248
    %v264 = vpop.permute.xlu0 %263
    %267 = vset.pattern.permute.xlu0 0
    %268 = vperm.xlu0 %267, %v249
    %v269 = vpop.permute.xlu0 %268
    %272 = vset.pattern.permute.xlu0 0
    %273 = vperm.xlu0 %272, %v250
    %v274 = vpop.permute.xlu0 %273
    %v276 = vmul.f32 %v254, %v241
    %v277 = vmul.f32 %v259, %v242
    %v278 = vmul.f32 %v264, %v243
    %v279 = vmul.f32 %v269, %v244
    %v280 = vmul.f32 %v274, %v245
    %v281 = vadd.f32 %v276, %v277
    %v282 = vadd.f32 %v281, %v278
    %v283 = vadd.f32 %v282, %v279
    %v284 = vadd.f32 %v283, %v280
    %v285 = vrot.slane %v284, 4
    %v286 = vadd.f32 %v284, %v285
    %v287 = vrot.slane %v286, 2
    %v288 = vadd.f32 %v286, %v287
    %v289 = vrot.slane %v288, 1
    %v290 = vadd.f32 %v288, %v289
    %s291 = sld [smem:[#allocation2]]
    %v292 = vstv %s291
    %v293 = vadd.f32 %v290, %v292
    %294 = vst [vmem:[#allocation3] sm:$0x1] %v293
    // Predicated region
    $region30: #{tpu_custom_call.1} parent=1 // pred_check
      _
    $region31: #{tpu_custom_call.1} parent=1 // pred_check_branch
      %296 = sbr.rel (0) target = $region33
    $region32: #{tpu_custom_call.1} parent=1 // pred_region
      %s298 = ssub.s32 16, 16
      %299 = vsyncadd [#allocation4], %s298
      %s300 = smul.addr %s11, 16
      %s301 = scalar_lea.hbm %s7, %s300
      %s303 = sshll.u32 [#allocation3], 4
      %s304 = int_to_ptr.vmem [resolvable:$true] %s303
      %306 = dma.vmem_to_hbm [thread:$0]  %s304, 16, %s301, [#allocation4]
    $region33: #{tpu_custom_call.1} parent=1 // pred_fallthru
      _
    // Predicated region
    $region34: #{tpu_custom_call.1} parent=1 // pred_check
      _
    $region35: #{tpu_custom_call.1} parent=1 // pred_check_branch
      %308 = sbr.rel (0) target = $region37
    $region36: #{tpu_custom_call.1} parent=1 // pred_region
      %309 = dma.done [#allocation4], 16
    $region37: #{tpu_custom_call.1} parent=1 // pred_fallthru
      _
    %310 = vsyncpa [#allocation4], 1

// kernel: tpu_custom_call.1
$region0: #{tpu_custom_call.1}
  #allocation0 [shape = 'u32[]', space=smem, size = 0x4, offset = 0x4, fixed_abs, tag = 'smem constant byte address 0x4 - core index']
  #allocation1 [shape = 'u32[144,128]{1,0:T(1,128)}', space=vmem, size = 0x12000, scoped, tag = 'internal scratch']
  #allocation2 [shape = 'f32[1,1]{1,0:T(1,128)S(6)}', space=smem, size = 0x200, scoped, tag = 'scoped memory for tpu_custom_call.1']
  %s0 = inlined_call_operand.vmem [shape: f32[1,128], index: 0, kind: input, shape index: {}]
  %s1 = inlined_call_operand.vmem [shape: f32[40,1], index: 1, kind: input, shape index: {}]
  %s2 = inlined_call_operand.vmem [shape: f32[40,1], index: 2, kind: input, shape index: {}]
  %s3 = inlined_call_operand.vmem [shape: bf16[40,40], index: 3, kind: input, shape index: {}]
  %s4 = inlined_call_operand.vmem [shape: f32[40,1], index: 4, kind: input, shape index: {}]
  %s5 = inlined_call_operand.vmem [shape: f32[40,1], index: 5, kind: input, shape index: {}]
  %s6 = inlined_call_operand.<no memory space> [shape: f32[1,1], index: 6, kind: input, shape index: {}]
  %s7 = inlined_call_operand.hbm [shape: f32[1,128], index: 7, kind: output, shape index: {}]
  %s8 = sld [smem:[#allocation0]]
  $region38: #{tpu_custom_call.1} parent=0
    _
  %s10 = ssub.s32 1, %s8
  %s11 = scalar_select 0, %s10, %s8
  %12 = sst [smem:[#allocation2]] %s6
  $region1: #{tpu_custom_call.1} parent=0
    #allocation3 [shape = 'u8[512]{0}', space=vmem, size = 0x400, scoped, tag = 'output window, operand 0, single buffered']
    #allocation4 [shape = 's32[1]{0}', space=sflag, size = 0x4, scoped, tag = 'scoped memory for tpu_custom_call.1']
    %13 = vsyncpa [#allocation4], 0
    // Predicated region
    $region2: #{tpu_custom_call.1} parent=1 // pred_check
      _
    $region3: #{tpu_custom_call.1} parent=1 // pred_check_branch
      %15 = sbr.rel (0) target = $region5
    $region4: #{tpu_custom_call.1} parent=1 // pred_region
      _
    $region5: #{tpu_custom_call.1} parent=1 // pred_fallthru
      _
    // Predicated region
    $region6: #{tpu_custom_call.1} parent=1 // pred_check
      _
    $region7: #{tpu_custom_call.1} parent=1 // pred_check_branch
      %17 = sbr.rel (0) target = $region9
    $region8: #{tpu_custom_call.1} parent=1 // pred_region
      _
    $region9: #{tpu_custom_call.1} parent=1 // pred_fallthru
      _
    // Predicated region
    $region10: #{tpu_custom_call.1} parent=1 // pred_check
      _
    $region11: #{tpu_custom_call.1} parent=1 // pred_check_branch
      %19 = sbr.rel (0) target = $region13
    $region12: #{tpu_custom_call.1} parent=1 // pred_region
      _
    $region13: #{tpu_custom_call.1} parent=1 // pred_fallthru
      _
    // Predicated region
    $region14: #{tpu_custom_call.1} parent=1 // pred_check
      _
    $region15: #{tpu_custom_call.1} parent=1 // pred_check_branch
      %21 = sbr.rel (0) target = $region17
    $region16: #{tpu_custom_call.1} parent=1 // pred_region
      _
    $region17: #{tpu_custom_call.1} parent=1 // pred_fallthru
      _
    // Predicated region
    $region18: #{tpu_custom_call.1} parent=1 // pred_check
      _
    $region19: #{tpu_custom_call.1} parent=1 // pred_check_branch
      %23 = sbr.rel (0) target = $region21
    $region20: #{tpu_custom_call.1} parent=1 // pred_region
      _
    $region21: #{tpu_custom_call.1} parent=1 // pred_fallthru
      _
    // Predicated region
    $region22: #{tpu_custom_call.1} parent=1 // pred_check
      _
    $region23: #{tpu_custom_call.1} parent=1 // pred_check_branch
      %25 = sbr.rel (0) target = $region25
    $region24: #{tpu_custom_call.1} parent=1 // pred_region
      _
    $region25: #{tpu_custom_call.1} parent=1 // pred_fallthru
      _
    // Predicated region
    $region26: #{tpu_custom_call.1} parent=1 // pred_check
      _
    $region27: #{tpu_custom_call.1} parent=1 // pred_check_branch
      %27 = sbr.rel (0) target = $region29
    $region28: #{tpu_custom_call.1} parent=1 // pred_region
      _
    $region29: #{tpu_custom_call.1} parent=1 // pred_fallthru
      _
    %v29 = vld [vmem:[%s0] sm:$0x1]
    %v30 = vld [vmem:[%s1] sm:$0xff]
    %v31 = vld [vmem:[%s1 + $0x8] sm:$0xff]
    %v32 = vld [vmem:[%s1 + $0x10] sm:$0xff]
    %v33 = vld [vmem:[%s1 + $0x18] sm:$0xff]
    %v34 = vld [vmem:[%s1 + $0x20] sm:$0xff]
    %36 = vset.pattern.permute.xlu0 0
    %37 = vperm.xlu0 %36, %v30
    %v38 = vpop.permute.xlu0 %37
    %41 = vset.pattern.permute.xlu0 0
    %42 = vperm.xlu0 %41, %v31
    %v43 = vpop.permute.xlu0 %42
    %46 = vset.pattern.permute.xlu0 0
    %47 = vperm.xlu0 %46, %v32
    %v48 = vpop.permute.xlu0 %47
    %51 = vset.pattern.permute.xlu0 0
    %52 = vperm.xlu0 %51, %v33
    %v53 = vpop.permute.xlu0 %52
    %56 = vset.pattern.permute.xlu0 0
    %57 = vperm.xlu0 %56, %v34
    %v58 = vpop.permute.xlu0 %57
    %v61 = vlaneseq
    %v62 = vshrl.u32 %v61, 7
    %v63 = vsub.s32 0, %v62
    %v64 = vrot.slane %v29, %v63
    %v66 = vmul.f32 %v38, %v64
    %v67 = vmul.f32 %v43, %v64
    %v68 = vmul.f32 %v48, %v64
    %v69 = vmul.f32 %v53, %v64
    %v70 = vmul.f32 %v58, %v64
    %v71 = vld [vmem:[%s2] sm:$0xff]
    %v72 = vld [vmem:[%s2 + $0x8] sm:$0xff]
    %v73 = vld [vmem:[%s2 + $0x10] sm:$0xff]
    %v74 = vld [vmem:[%s2 + $0x18] sm:$0xff]
    %v75 = vld [vmem:[%s2 + $0x20] sm:$0xff]
    %77 = vset.pattern.permute.xlu0 0
    %78 = vperm.xlu0 %77, %v71
    %v79 = vpop.permute.xlu0 %78
    %82 = vset.pattern.permute.xlu0 0
    %83 = vperm.xlu0 %82, %v72
    %v84 = vpop.permute.xlu0 %83
    %87 = vset.pattern.permute.xlu0 0
    %88 = vperm.xlu0 %87, %v73
    %v89 = vpop.permute.xlu0 %88
    %92 = vset.pattern.permute.xlu0 0
    %93 = vperm.xlu0 %92, %v74
    %v94 = vpop.permute.xlu0 %93
    %97 = vset.pattern.permute.xlu0 0
    %98 = vperm.xlu0 %97, %v75
    %v99 = vpop.permute.xlu0 %98
    %v101 = vadd.f32 %v66, %v79
    %v102 = vadd.f32 %v67, %v84
    %v103 = vadd.f32 %v68, %v89
    %v104 = vadd.f32 %v69, %v94
    %v105 = vadd.f32 %v70, %v99
    %v106 = vmax.f32 %v101, 0.0
    %v107 = vmax.f32 %v102, 0.0
    %v108 = vmax.f32 %v103, 0.0
    %v109 = vmax.f32 %v104, 0.0
    %v110 = vmax.f32 %v105, 0.0
    %v111 = vld [vmem:[%s3] sm:$0xf]
    %v112 = vld [vmem:[%s3 + $0x4] sm:$0xf]
    %v113 = vld [vmem:[%s3 + $0x8] sm:$0xf]
    %v114 = vld [vmem:[%s3 + $0xc] sm:$0xf]
    %v115 = vld [vmem:[%s3 + $0x10] sm:$0xf]
    %v116 = vpack.c.bf16 %v107, %v106
    %v117 = vpack.c.bf16 %v109, %v108
    %v118 = vpack.c.bf16 %v110, %v110
    %v119 = vld [vmem:[%s4] sm:$0xff]
    %v120 = vld [vmem:[%s4 + $0x8] sm:$0xff]
    %v121 = vld [vmem:[%s4 + $0x10] sm:$0xff]
    %v122 = vld [vmem:[%s4 + $0x18] sm:$0xff]
    %v123 = vld [vmem:[%s4 + $0x20] sm:$0xff]
    %125 = vset.pattern.permute.xlu0 0
    %126 = vperm.xlu0 %125, %v119
    %v127 = vpop.permute.xlu0 %126
    %130 = vset.pattern.permute.xlu0 0
    %131 = vperm.xlu0 %130, %v120
    %v132 = vpop.permute.xlu0 %131
    %135 = vset.pattern.permute.xlu0 0
    %136 = vperm.xlu0 %135, %v121
    %v137 = vpop.permute.xlu0 %136
    %140 = vset.pattern.permute.xlu0 0
    %141 = vperm.xlu0 %140, %v122
    %v142 = vpop.permute.xlu0 %141
    %145 = vset.pattern.permute.xlu0 0
    %146 = vperm.xlu0 %145, %v123
    %v147 = vpop.permute.xlu0 %146
    %v154 = vunpack.c.l.b16 %v111
    %v155 = vunpack.c.l.b16 %v112
    %v156 = vunpack.c.l.b16 %v113
    %v157 = vunpack.c.l.b16 %v114
    %v158 = vunpack.c.l.b16 %v115
    %v159 = vpack.c.b16 %v155, %v154
    %v160 = vpack.c.b16 %v157, %v156
    %v161 = vpack.c.b16 %v158, %v158
    %vm162 = vcmask 326656
    %v164 = vsel %vm162, %v159, 0
    %v167 = vsel %vm162, %v160, 0
    %v170 = vsel %vm162, %v161, 0
    %vm172 = vcmask 1043456
    %v174 = vsel %vm172, %v118, 0
    %176 = vmatprep.subr.bf16.mxu0 0
    %177 = vmatpush1.bf16.msra.mxu0 0
    %178 = vmatprep.subr.bf16.mxu0 0
    %179 = vmatpush1.bf16.msra.mxu0 0
    %180 = vmatprep.subr.bf16.mxu0 0
    %181 = vmatpush1.bf16.msra.mxu0 0
    %182 = vmatprep.subr.bf16.mxu0 0
    %183 = vmatpush1.bf16.msra.mxu0 0
    %184 = vmatprep.subr.bf16.mxu0 0
    %185 = vmatpush1.bf16.msra.mxu0 0
    %186 = vmatprep.subr.bf16.mxu0 0
    %187 = vmatpush1.bf16.msra.mxu0 %v174
    %188 = vmatprep.subr.bf16.mxu0 0
    %189 = vmatpush1.bf16.msra.mxu0 %v117
    %190 = vmatprep.subr.bf16.mxu0 0
    %191 = vmatpush1.bf16.msra.mxu0 %v116
    %192 = vmatprep.subr.bf16.mxu0 0
    %193 = vmatpush2.bf16.msra.mxu0 0
    %194 = vmatprep.subr.bf16.mxu0 0
    %195 = vmatpush2.bf16.msra.mxu0 0
    %196 = vmatprep.subr.bf16.mxu0 0
    %197 = vmatpush2.bf16.msra.mxu0 0
    %198 = vmatprep.subr.bf16.mxu0 0
    %199 = vmatpush2.bf16.msra.mxu0 0
    %200 = vmatprep.subr.bf16.mxu0 0
    %201 = vmatpush2.bf16.msra.mxu0 0
    %202 = vmatprep.subr.bf16.mxu0 0
    %203 = vmatpush2.bf16.msra.mxu0 0
    %204 = vmatprep.subr.bf16.mxu0 0
    %205 = vmatpush2.bf16.msra.mxu0 0
    %206 = vmatprep.subr.bf16.mxu0 0
    %207 = vmatpush2.bf16.msra.mxu0 0
    %208 = vmatprep.mubr.bf16.mxu0 0
    %209 = vmatmul.mubr.bf16.gmra.mxu0 %v164
    %v210 = vpop.f32.mrf.mxu0
    %v211 = vadd.f32 %v127, %v210
    %v212 = vpop.f32.mrf.mxu0
    %v213 = vpop.f32.mrf.mxu0
    %v214 = vadd.f32 %v132, %v213
    %v215 = vpop.f32.mrf.mxu0
    %216 = vmatprep.mubr.bf16.mxu0 0
    %217 = vmatmul.mubr.bf16.gmra.mxu0 %v167
    %v218 = vpop.f32.mrf.mxu0
    %v219 = vadd.f32 %v137, %v218
    %v220 = vpop.f32.mrf.mxu0
    %v221 = vpop.f32.mrf.mxu0
    %v222 = vadd.f32 %v142, %v221
    %v223 = vpop.f32.mrf.mxu0
    %224 = vmatprep.mubr.bf16.mxu0 0
    %225 = vmatmul.mubr.bf16.gmra.mxu0 %v170
    %v226 = vpop.f32.mrf.mxu0
    %v227 = vadd.f32 %v147, %v226
    %v228 = vpop.f32.mrf.mxu0
    %v229 = vpop.f32.mrf.mxu0
    %v230 = vpop.f32.mrf.mxu0
    %231 = vdwg.mxu0
    %v232 = vmax.f32 %v211, 0.0
    %v233 = vmax.f32 %v214, 0.0
    %v234 = vmax.f32 %v219, 0.0
    %v235 = vmax.f32 %v222, 0.0
    %v236 = vmax.f32 %v227, 0.0
    %v237 = vld [vmem:[%s5] sm:$0xff]
    %v238 = vld [vmem:[%s5 + $0x8] sm:$0xff]
    %v239 = vld [vmem:[%s5 + $0x10] sm:$0xff]
    %v240 = vld [vmem:[%s5 + $0x18] sm:$0xff]
    %v241 = vld [vmem:[%s5 + $0x20] sm:$0xff]
    %243 = vset.pattern.permute.xlu0 0
    %244 = vperm.xlu0 %243, %v237
    %v245 = vpop.permute.xlu0 %244
    %248 = vset.pattern.permute.xlu0 0
    %249 = vperm.xlu0 %248, %v238
    %v250 = vpop.permute.xlu0 %249
    %253 = vset.pattern.permute.xlu0 0
    %254 = vperm.xlu0 %253, %v239
    %v255 = vpop.permute.xlu0 %254
    %258 = vset.pattern.permute.xlu0 0
    %259 = vperm.xlu0 %258, %v240
    %v260 = vpop.permute.xlu0 %259
    %263 = vset.pattern.permute.xlu0 0
    %264 = vperm.xlu0 %263, %v241
    %v265 = vpop.permute.xlu0 %264
    %v267 = vmul.f32 %v245, %v232
    %v268 = vmul.f32 %v250, %v233
    %v269 = vmul.f32 %v255, %v234
    %v270 = vmul.f32 %v260, %v235
    %v271 = vmul.f32 %v265, %v236
    %v272 = vadd.f32 %v267, %v268
    %v273 = vadd.f32 %v272, %v269
    %v274 = vadd.f32 %v273, %v270
    %v275 = vadd.f32 %v274, %v271
    %v276 = vrot.slane %v275, 4
    %v277 = vadd.f32 %v275, %v276
    %v278 = vrot.slane %v277, 2
    %v279 = vadd.f32 %v277, %v278
    %v280 = vrot.slane %v279, 1
    %v281 = vadd.f32 %v279, %v280
    %s282 = sld [smem:[#allocation2]]
    %v283 = vstv %s282
    %v284 = vadd.f32 %v281, %v283
    %285 = vst [vmem:[#allocation3] sm:$0x1] %v284
    // Predicated region
    $region30: #{tpu_custom_call.1} parent=1 // pred_check
      _
    $region31: #{tpu_custom_call.1} parent=1 // pred_check_branch
      %287 = sbr.rel (0) target = $region33
    $region32: #{tpu_custom_call.1} parent=1 // pred_region
      %s289 = ssub.s32 16, 16
      %290 = vsyncadd [#allocation4], %s289
      %s292 = sshll.u32 [#allocation3], 4
      %s293 = int_to_ptr.vmem [resolvable:$true] %s292
      %295 = dma.vmem_to_hbm [thread:$0]  %s293, 16, %s7, [#allocation4]
    $region33: #{tpu_custom_call.1} parent=1 // pred_fallthru
      _
    // Predicated region
    $region34: #{tpu_custom_call.1} parent=1 // pred_check
      _
    $region35: #{tpu_custom_call.1} parent=1 // pred_check_branch
      %297 = sbr.rel (0) target = $region37
    $region36: #{tpu_custom_call.1} parent=1 // pred_region
      %298 = dma.done [#allocation4], 16
    $region37: #{tpu_custom_call.1} parent=1 // pred_fallthru
      _
    %299 = vsyncpa [#allocation4], 1

</llo_original>
